<compile_context>
chip_gen: v5e
topology: v5e:2x2
jax: 0.10.0
libtpu: 0.0.40
codegen_flags: <defaults>
</compile_context>

<pallas_src>
import jax
import jax.numpy as jnp
import numpy as np
from jax import lax
from jax.experimental import pallas as pl
from jax.experimental.pallas import tpu as pltpu

NEG = -1e35          # masking constant used by the torch reference
_TINY = 1e-37        # guards log() against a fully-underflowed tail sum


def plhead_kernel(x_ref, w_ref, b_ref, u_ref, samples_ref, logps_ref, logits_ref):
    """Fused linear -> Gumbel-rank sampling -> Plackett-Luce log_prob.

    x_ref:       (Bt, D)    f32   natural batch-major input block
    w_ref:       (L, D)     f32   torch.nn.Linear weight layout
    b_ref:       (L, 1)     f32
    u_ref:       (S, L, Bt) f32   uniforms in (0, 1), batch on lanes
    samples_ref: (S, L, Bt) i32   samples[s, i, b] = element chosen at rank i
    logps_ref:   (S, Bt)    f32
    logits_ref:  (L, Bt)    f32
    """
    x = x_ref[...]
    w = w_ref[...]
    bias = b_ref[...]

    # ---- linear: logits[l, b] = sum_d W[l, d] * x[b, d] + bias[l] (MXU) ----
    # Contract last-with-last (A @ B^T form) so the untransposed (Bt, D) block
    # feeds the MXU directly; no wrapper-side transpose of x.
    logits = lax.dot_general(w, x, (((1,), (1,)), ((), ())),
                             preferred_element_type=jnp.float32) + bias   # (L, Bt)
    logits_ref[...] = logits

    u = jnp.clip(u_ref[...], 1e-7, 1.0 - 1e-7)       # avoid inf/NaN Gumbels
    S, L, Bt = u.shape
    gumbel = -jnp.log(-jnp.log(u))                   # standard Gumbel noise
    scores = logits[None] + gumbel                   # (S, L, Bt)

    elem = lax.broadcasted_iota(jnp.int32, (S, L, Bt), 1)   # element id (sublane)

    # ---- ranks (descending): rank[s, j, b] =
    #        #{k : score_k > score_j or (score_k == score_j and k < j)} ----
    # Fully parallel broadcast compares; int32 bookkeeping throughout.
    rank = jnp.zeros((S, L, Bt), jnp.int32)
    for k in range(L):
        s_k = scores[:, k:k + 1, :]                                  # (S,1,Bt)
        beats = (s_k > scores) | ((s_k == scores) & (k < elem))
        rank = rank + beats.astype(jnp.int32)

    # ---- Plackett-Luce log prob with a running tail + coalesced sample store ----
    m = jnp.max(logits, axis=0, keepdims=True)                       # (1, Bt)
    e = jnp.exp(logits - m)                                          # (L, Bt)
    e3 = jnp.broadcast_to(e[None], (S, L, Bt))                       # hoisted

    tail = jnp.sum(e3, axis=1)                                       # (S, Bt)
    sum_log_tail = jnp.zeros((S, Bt), jnp.float32)
    samples = jnp.zeros((S, L, Bt), jnp.int32)
    for i in range(L):
        sel = rank == i                                # one mask, reused twice
        sum_log_tail = sum_log_tail + jnp.log(jnp.maximum(tail, _TINY))
        tail = tail - jnp.sum(jnp.where(sel, e3, 0.0), axis=1)       # running tail
        chosen = jnp.sum(jnp.where(sel, elem, 0), axis=1, keepdims=True)  # (S,1,Bt)
        samples = jnp.where(elem == i, chosen, samples)   # place at rank position i
    samples_ref[...] = samples                            # single unmasked store

    sum_z = jnp.sum(logits - m, axis=0, keepdims=True)               # (1, Bt)
    logps_ref[...] = sum_z - sum_log_tail                            # (S, Bt)


def _choose_batch_tile(B):
    """Pick a lane-dense batch tile; prefer >=2 grid steps for v7x megacore."""
    if B < 128:
        return 128
    for t in (1024, 512, 256, 128):
        if B % t == 0 and B // t >= 2:
            return t
    for t in (1024, 512, 256, 128):
        if B % t == 0:
            return t
    return 256   # ragged large batch: pad up to a multiple of 256


def plhead_forward(x, weight, bias, uniforms):
    """x: (B, D); weight: (L, D); bias: (L,); uniforms: (S, L, B) in (0, 1).

    uniforms are taken in sampler layout (S, L, B) — they are i.i.d., so the
    layout is free and this avoids a wrapper-side transpose/staging pass.

    Returns (samples (B, S, L) i32, logps (B, S) f32, logits (B, L) f32),
    matching PLHead.forward's output conventions.
    """
    B, D = x.shape
    L = weight.shape[0]
    S = uniforms.shape[0]

    b_tile = _choose_batch_tile(B)
    b_pad = ((B + b_tile - 1) // b_tile) * b_tile
    grid_b = b_pad // b_tile

    x_f = x.astype(jnp.float32)
    u_f = uniforms.astype(jnp.float32)
    if b_pad != B:
        # Only materialize padded copies for ragged batches; padding columns get
        # harmless dummy values and are sliced off afterwards.
        x_f = jnp.pad(x_f, ((0, b_pad - B), (0, 0)))
        u_f = jnp.pad(u_f, ((0, 0), (0, 0), (0, b_pad - B)), constant_values=0.5)
    w = weight.astype(jnp.float32)
    b = bias.reshape(L, 1).astype(jnp.float32)

    # Explicit VMEM budget: double-buffered ins/outs + intermediate headroom.
    blk_bytes = 4 * b_tile * (D + 2 * S * L + S + L) + 4 * L * (D + 1)
    vmem_limit = int(min(96 * 2 ** 20, max(32 * 2 ** 20, 8 * blk_bytes)))

    samples_t, logps_t, logits_t = pl.pallas_call(
        plhead_kernel,
        grid=(grid_b,),
        in_specs=[
            pl.BlockSpec((b_tile, D), lambda i: (i, 0)),
            pl.BlockSpec((L, D), lambda i: (0, 0)),
            pl.BlockSpec((L, 1), lambda i: (0, 0)),
            pl.BlockSpec((S, L, b_tile), lambda i: (0, 0, i)),
        ],
        out_specs=[
            pl.BlockSpec((S, L, b_tile), lambda i: (0, 0, i)),
            pl.BlockSpec((S, b_tile), lambda i: (0, i)),
            pl.BlockSpec((L, b_tile), lambda i: (0, i)),
        ],
        out_shape=(
            jax.ShapeDtypeStruct((S, L, b_pad), jnp.int32),
            jax.ShapeDtypeStruct((S, b_pad), jnp.float32),
            jax.ShapeDtypeStruct((L, b_pad), jnp.float32),
        ),
        compiler_params=pltpu.CompilerParams(
            dimension_semantics=("parallel",),
            vmem_limit_bytes=vmem_limit),
    )(x_f, w, b, u_f)

    # Back to PyTorch output conventions (wrapper-side layout plumbing).
    samples = jnp.transpose(samples_t[:, :, :B], (2, 0, 1))   # (B, S, L)
    logps = logps_t[:, :B].T                                  # (B, S)
    logits = logits_t[:, :B].T                                # (B, L)
    return samples, logps, logits


# ---------------- pure-JAX reference (for a silent sanity check) ----------------
def _ref_log_prob(logits, value):
    """PlackettLuce.log_prob, torch-style per-step recompute."""
    S, B, L = value.shape
    lg = jnp.broadcast_to(logits[None], (S, B, L)).astype(jnp.float32)
    lp = jnp.zeros((S, B), jnp.float32)
    iota = lax.broadcasted_iota(jnp.int32, (S, B, L), 2)
    for i in range(L):
        lsm = jax.nn.log_softmax(lg, axis=-1)
        lp = lp + jnp.take_along_axis(lsm, value[..., i:i + 1], axis=-1)[..., 0]
        lg = jnp.where(iota == value[..., i:i + 1], NEG, lg)
    return lp


if __name__ == "__main__":
    # Small shapes consistent with the module: input_dim=32, sample_length=8,
    # num_samples=3, batch=4.
    B, D, L, S = 4, 32, 8, 3

    key = jax.random.PRNGKey(0)
    kx, kw, kb, ku = jax.random.split(key, 4)
    x = jax.random.normal(kx, (B, D), dtype=jnp.float32)
    weight = jax.random.normal(kw, (L, D), dtype=jnp.float32) * 0.1  # nn.Linear weight
    bias = jax.random.normal(kb, (L,), dtype=jnp.float32) * 0.1      # nn.Linear bias
    uniforms = jax.random.uniform(ku, (S, L, B), minval=1e-6, maxval=1.0 - 1e-6)

    samples, logps, logits = plhead_forward(x, weight, bias, uniforms)
    jax.block_until_ready((samples, logps, logits))

    # --- silent correctness checks against plain JAX / numpy ---
    # 1) logits = x @ W^T + b
    logits_ref = x @ weight.T + bias
    np.testing.assert_allclose(np.asarray(logits), np.asarray(logits_ref),
                               rtol=1e-5, atol=1e-5)
    # 2) every sample row must be a permutation of 0..L-1
    sorted_rows = np.sort(np.asarray(samples), axis=-1)
    assert np.all(sorted_rows == np.arange(L, dtype=np.int32))
    # 3) samples must order the Gumbel-perturbed logits in descending order
    g = -np.log(-np.log(np.clip(np.asarray(uniforms, np.float32),
                                1e-7, 1.0 - 1e-7)))               # (S, L, B)
    sc = np.asarray(logits, np.float32)[None] + np.transpose(g, (0, 2, 1))  # (S,B,L)
    gathered = np.take_along_axis(sc, np.asarray(samples).transpose(1, 0, 2),
                                  axis=-1)
    assert np.all(np.diff(gathered, axis=-1) <= 1e-4)
    # 4) log-probs must match the PlackettLuce.log_prob reference for these samples
    logps_ref = _ref_log_prob(jnp.asarray(logits_ref),
                              jnp.asarray(samples).transpose(1, 0, 2))
    np.testing.assert_allclose(np.asarray(logps), np.asarray(logps_ref).T,
                               rtol=1e-4, atol=1e-4)

    print("KERNEL_OK")
</pallas_src>

<mosaic_0001>
module attributes {stable_mosaic.version = 11 : i64} {
  func.func @plhead_kernel(%arg0: i32, %arg1: memref<128x32xf32, #tpu.memory_space<vmem>>, %arg2: memref<8x32xf32, #tpu.memory_space<vmem>>, %arg3: memref<8x1xf32, #tpu.memory_space<vmem>>, %arg4: memref<3x8x128xf32, #tpu.memory_space<vmem>>, %arg5: memref<3x8x128xi32, #tpu.memory_space<vmem>>, %arg6: memref<3x128xf32, #tpu.memory_space<vmem>>, %arg7: memref<8x128xf32, #tpu.memory_space<vmem>>) attributes {dimension_semantics = [#tpu.dimension_semantics<parallel>], iteration_bounds = array<i64: 1>, scalar_prefetch = 0 : i64, scratch_operands = 0 : i64, tpu.core_type = #tpu.core_type<tc>, window_params = [{transform_indices = @transform_0, window_bounds = array<i64: 128, 32>}, {pipeline_mode = #tpu.pipeline_mode<synchronous>, transform_indices = @transform_1, window_bounds = array<i64: 8, 32>}, {pipeline_mode = #tpu.pipeline_mode<synchronous>, transform_indices = @transform_2, window_bounds = array<i64: 8, 1>}, {transform_indices = @transform_3, window_bounds = array<i64: 3, 8, 128>}, {transform_indices = @transform_4, window_bounds = array<i64: 3, 8, 128>}, {transform_indices = @transform_5, window_bounds = array<i64: 3, 128>}, {transform_indices = @transform_6, window_bounds = array<i64: 8, 128>}]} {
    %c0 = arith.constant 0 : index
    %c0_0 = arith.constant 0 : index
    %0 = vector.load %arg1[%c0, %c0_0] : memref<128x32xf32, #tpu.memory_space<vmem>>, vector<128x32xf32>
    %c0_1 = arith.constant 0 : index
    %c0_2 = arith.constant 0 : index
    %1 = vector.load %arg2[%c0_1, %c0_2] : memref<8x32xf32, #tpu.memory_space<vmem>>, vector<8x32xf32>
    %c0_3 = arith.constant 0 : index
    %c0_4 = arith.constant 0 : index
    %2 = vector.load %arg3[%c0_3, %c0_4] : memref<8x1xf32, #tpu.memory_space<vmem>>, vector<8x1xf32>
    %cst = arith.constant dense<0.000000e+00> : vector<8x128xf32>
    %3 = tpu.matmul %1, %0, %cst {dimension_numbers = #tpu.dot_dimension_numbers<[1], [1], [0], [0], [0, 0, 1, 0], [], []>} : vector<8x32xf32>, vector<128x32xf32>, vector<8x128xf32> -> vector<8x128xf32>
    %4 = vector.broadcast %2 : vector<8x1xf32> to vector<8x128xf32>
    %5 = arith.addf %3, %4 : vector<8x128xf32>
    %c0_5 = arith.constant 0 : index
    %c0_6 = arith.constant 0 : index
    %6 = vector.load %arg7[%c0_5, %c0_6] : memref<8x128xf32, #tpu.memory_space<vmem>>, vector<8x128xf32>
    tpu.vector_store %arg7[%c0_5, %c0_6], %5 {strides = array<i32>} : memref<8x128xf32, #tpu.memory_space<vmem>>, vector<8x128xf32>,
    %c0_7 = arith.constant 0 : index
    %c0_8 = arith.constant 0 : index
    %c0_9 = arith.constant 0 : index
    %7 = vector.load %arg4[%c0_7, %c0_8, %c0_9] : memref<3x8x128xf32, #tpu.memory_space<vmem>>, vector<3x8x128xf32>
    %cst_10 = arith.constant 1.000000e-07 : f32
    %cst_11 = arith.constant 0.99999988 : f32
    %8 = vector.broadcast %cst_10 : f32 to vector<3x8x128xf32>
    %9 = arith.maximumf %8, %7 : vector<3x8x128xf32>
    %10 = vector.broadcast %cst_11 : f32 to vector<3x8x128xf32>
    %11 = arith.minimumf %10, %9 : vector<3x8x128xf32>
    %12 = math.log %11 : vector<3x8x128xf32>
    %cst_12 = arith.constant 0.000000e+00 : f32
    %13 = vector.broadcast %cst_12 : f32 to vector<3x8x128xf32>
    %14 = arith.subf %13, %12 : vector<3x8x128xf32>
    %15 = math.log %14 : vector<3x8x128xf32>
    %cst_13 = arith.constant 0.000000e+00 : f32
    %16 = vector.broadcast %cst_13 : f32 to vector<3x8x128xf32>
    %17 = arith.subf %16, %15 : vector<3x8x128xf32>
    %18 = vector.shape_cast %5 : vector<8x128xf32> to vector<1x8x128xf32>
    %19 = vector.broadcast %18 : vector<1x8x128xf32> to vector<3x8x128xf32>
    %20 = arith.addf %19, %17 : vector<3x8x128xf32>
    %21 = tpu.iota {dimensions = array<i32: 1>} : vector<3x8x128xi32>
    %c0_i32 = arith.constant 0 : i32
    %22 = vector.broadcast %c0_i32 : i32 to vector<3x8x128xi32>
    %23 = vector.extract_strided_slice %20 {offsets = [0, 0, 0], sizes = [3, 1, 128], strides = [1, 1, 1]} : vector<3x8x128xf32> to vector<3x1x128xf32>
    %24 = vector.broadcast %23 : vector<3x1x128xf32> to vector<3x8x128xf32>
    %25 = arith.cmpf ogt, %24, %20 : vector<3x8x128xf32>
    %26 = vector.broadcast %23 : vector<3x1x128xf32> to vector<3x8x128xf32>
    %27 = arith.cmpf oeq, %26, %20 : vector<3x8x128xf32>
    %c0_i32_14 = arith.constant 0 : i32
    %28 = vector.broadcast %c0_i32_14 : i32 to vector<3x8x128xi32>
    %29 = arith.cmpi sgt, %21, %28 : vector<3x8x128xi32>
    %30 = arith.andi %27, %29 : vector<3x8x128xi1>
    %31 = arith.ori %25, %30 : vector<3x8x128xi1>
    %32 = arith.extui %31 : vector<3x8x128xi1> to vector<3x8x128xi32>
    %33 = arith.addi %22, %32 : vector<3x8x128xi32>
    %34 = vector.extract_strided_slice %20 {offsets = [0, 1, 0], sizes = [3, 1, 128], strides = [1, 1, 1]} : vector<3x8x128xf32> to vector<3x1x128xf32>
    %35 = vector.broadcast %34 : vector<3x1x128xf32> to vector<3x8x128xf32>
    %36 = arith.cmpf ogt, %35, %20 : vector<3x8x128xf32>
    %37 = vector.broadcast %34 : vector<3x1x128xf32> to vector<3x8x128xf32>
    %38 = arith.cmpf oeq, %37, %20 : vector<3x8x128xf32>
    %c1_i32 = arith.constant 1 : i32
    %39 = vector.broadcast %c1_i32 : i32 to vector<3x8x128xi32>
    %40 = arith.cmpi sgt, %21, %39 : vector<3x8x128xi32>
    %41 = arith.andi %38, %40 : vector<3x8x128xi1>
    %42 = arith.ori %36, %41 : vector<3x8x128xi1>
    %43 = arith.extui %42 : vector<3x8x128xi1> to vector<3x8x128xi32>
    %44 = arith.addi %33, %43 : vector<3x8x128xi32>
    %45 = vector.extract_strided_slice %20 {offsets = [0, 2, 0], sizes = [3, 1, 128], strides = [1, 1, 1]} : vector<3x8x128xf32> to vector<3x1x128xf32>
    %46 = vector.broadcast %45 : vector<3x1x128xf32> to vector<3x8x128xf32>
    %47 = arith.cmpf ogt, %46, %20 : vector<3x8x128xf32>
    %48 = vector.broadcast %45 : vector<3x1x128xf32> to vector<3x8x128xf32>
    %49 = arith.cmpf oeq, %48, %20 : vector<3x8x128xf32>
    %c2_i32 = arith.constant 2 : i32
    %50 = vector.broadcast %c2_i32 : i32 to vector<3x8x128xi32>
    %51 = arith.cmpi sgt, %21, %50 : vector<3x8x128xi32>
    %52 = arith.andi %49, %51 : vector<3x8x128xi1>
    %53 = arith.ori %47, %52 : vector<3x8x128xi1>
    %54 = arith.extui %53 : vector<3x8x128xi1> to vector<3x8x128xi32>
    %55 = arith.addi %44, %54 : vector<3x8x128xi32>
    %56 = vector.extract_strided_slice %20 {offsets = [0, 3, 0], sizes = [3, 1, 128], strides = [1, 1, 1]} : vector<3x8x128xf32> to vector<3x1x128xf32>
    %57 = vector.broadcast %56 : vector<3x1x128xf32> to vector<3x8x128xf32>
    %58 = arith.cmpf ogt, %57, %20 : vector<3x8x128xf32>
    %59 = vector.broadcast %56 : vector<3x1x128xf32> to vector<3x8x128xf32>
    %60 = arith.cmpf oeq, %59, %20 : vector<3x8x128xf32>
    %c3_i32 = arith.constant 3 : i32
    %61 = vector.broadcast %c3_i32 : i32 to vector<3x8x128xi32>
    %62 = arith.cmpi sgt, %21, %61 : vector<3x8x128xi32>
    %63 = arith.andi %60, %62 : vector<3x8x128xi1>
    %64 = arith.ori %58, %63 : vector<3x8x128xi1>
    %65 = arith.extui %64 : vector<3x8x128xi1> to vector<3x8x128xi32>
    %66 = arith.addi %55, %65 : vector<3x8x128xi32>
    %67 = vector.extract_strided_slice %20 {offsets = [0, 4, 0], sizes = [3, 1, 128], strides = [1, 1, 1]} : vector<3x8x128xf32> to vector<3x1x128xf32>
    %68 = vector.broadcast %67 : vector<3x1x128xf32> to vector<3x8x128xf32>
    %69 = arith.cmpf ogt, %68, %20 : vector<3x8x128xf32>
    %70 = vector.broadcast %67 : vector<3x1x128xf32> to vector<3x8x128xf32>
    %71 = arith.cmpf oeq, %70, %20 : vector<3x8x128xf32>
    %c4_i32 = arith.constant 4 : i32
    %72 = vector.broadcast %c4_i32 : i32 to vector<3x8x128xi32>
    %73 = arith.cmpi sgt, %21, %72 : vector<3x8x128xi32>
    %74 = arith.andi %71, %73 : vector<3x8x128xi1>
    %75 = arith.ori %69, %74 : vector<3x8x128xi1>
    %76 = arith.extui %75 : vector<3x8x128xi1> to vector<3x8x128xi32>
    %77 = arith.addi %66, %76 : vector<3x8x128xi32>
    %78 = vector.extract_strided_slice %20 {offsets = [0, 5, 0], sizes = [3, 1, 128], strides = [1, 1, 1]} : vector<3x8x128xf32> to vector<3x1x128xf32>
    %79 = vector.broadcast %78 : vector<3x1x128xf32> to vector<3x8x128xf32>
    %80 = arith.cmpf ogt, %79, %20 : vector<3x8x128xf32>
    %81 = vector.broadcast %78 : vector<3x1x128xf32> to vector<3x8x128xf32>
    %82 = arith.cmpf oeq, %81, %20 : vector<3x8x128xf32>
    %c5_i32 = arith.constant 5 : i32
    %83 = vector.broadcast %c5_i32 : i32 to vector<3x8x128xi32>
    %84 = arith.cmpi sgt, %21, %83 : vector<3x8x128xi32>
    %85 = arith.andi %82, %84 : vector<3x8x128xi1>
    %86 = arith.ori %80, %85 : vector<3x8x128xi1>
    %87 = arith.extui %86 : vector<3x8x128xi1> to vector<3x8x128xi32>
    %88 = arith.addi %77, %87 : vector<3x8x128xi32>
    %89 = vector.extract_strided_slice %20 {offsets = [0, 6, 0], sizes = [3, 1, 128], strides = [1, 1, 1]} : vector<3x8x128xf32> to vector<3x1x128xf32>
    %90 = vector.broadcast %89 : vector<3x1x128xf32> to vector<3x8x128xf32>
    %91 = arith.cmpf ogt, %90, %20 : vector<3x8x128xf32>
    %92 = vector.broadcast %89 : vector<3x1x128xf32> to vector<3x8x128xf32>
    %93 = arith.cmpf oeq, %92, %20 : vector<3x8x128xf32>
    %c6_i32 = arith.constant 6 : i32
    %94 = vector.broadcast %c6_i32 : i32 to vector<3x8x128xi32>
    %95 = arith.cmpi sgt, %21, %94 : vector<3x8x128xi32>
    %96 = arith.andi %93, %95 : vector<3x8x128xi1>
    %97 = arith.ori %91, %96 : vector<3x8x128xi1>
    %98 = arith.extui %97 : vector<3x8x128xi1> to vector<3x8x128xi32>
    %99 = arith.addi %88, %98 : vector<3x8x128xi32>
    %100 = vector.extract_strided_slice %20 {offsets = [0, 7, 0], sizes = [3, 1, 128], strides = [1, 1, 1]} : vector<3x8x128xf32> to vector<3x1x128xf32>
    %101 = vector.broadcast %100 : vector<3x1x128xf32> to vector<3x8x128xf32>
    %102 = arith.cmpf ogt, %101, %20 : vector<3x8x128xf32>
    %103 = vector.broadcast %100 : vector<3x1x128xf32> to vector<3x8x128xf32>
    %104 = arith.cmpf oeq, %103, %20 : vector<3x8x128xf32>
    %c7_i32 = arith.constant 7 : i32
    %105 = vector.broadcast %c7_i32 : i32 to vector<3x8x128xi32>
    %106 = arith.cmpi sgt, %21, %105 : vector<3x8x128xi32>
    %107 = arith.andi %104, %106 : vector<3x8x128xi1>
    %108 = arith.ori %102, %107 : vector<3x8x128xi1>
    %109 = arith.extui %108 : vector<3x8x128xi1> to vector<3x8x128xi32>
    %110 = arith.addi %99, %109 : vector<3x8x128xi32>
    %cst_15 = arith.constant dense<0xFF800000> : vector<128xf32>
    %111 = vector.multi_reduction <maximumf>, %5, %cst_15 [0] : vector<8x128xf32> to vector<128xf32>
    %112 = vector.shape_cast %111 : vector<128xf32> to vector<1x128xf32>
    %113 = vector.broadcast %112 : vector<1x128xf32> to vector<8x128xf32>
    %114 = arith.subf %5, %113 : vector<8x128xf32>
    %115 = math.exp %114 : vector<8x128xf32>
    %116 = vector.shape_cast %115 : vector<8x128xf32> to vector<1x8x128xf32>
    %117 = vector.shape_cast %116 : vector<1x8x128xf32> to vector<1x8x128xf32>
    %118 = vector.broadcast %117 : vector<1x8x128xf32> to vector<3x8x128xf32>
    %cst_16 = arith.constant dense<0.000000e+00> : vector<3x128xf32>
    %119 = vector.multi_reduction <add>, %118, %cst_16 [1] : vector<3x8x128xf32> to vector<3x128xf32>
    %cst_17 = arith.constant 0.000000e+00 : f32
    %120 = vector.broadcast %cst_17 : f32 to vector<3x128xf32>
    %c0_i32_18 = arith.constant 0 : i32
    %121 = vector.broadcast %c0_i32_18 : i32 to vector<3x8x128xi32>
    %c0_i32_19 = arith.constant 0 : i32
    %122 = vector.broadcast %c0_i32_19 : i32 to vector<3x8x128xi32>
    %123 = arith.cmpi eq, %110, %122 : vector<3x8x128xi32>
    %cst_20 = arith.constant 9.99999991E-38 : f32
    %124 = vector.broadcast %cst_20 : f32 to vector<3x128xf32>
    %125 = arith.maximumf %119, %124 : vector<3x128xf32>
    %126 = math.log %125 : vector<3x128xf32>
    %127 = arith.addf %120, %126 : vector<3x128xf32>
    %cst_21 = arith.constant 0.000000e+00 : f32
    %128 = vector.broadcast %cst_21 : f32 to vector<3x8x128xf32>
    %129 = arith.select %123, %118, %128 : vector<3x8x128xi1>, vector<3x8x128xf32>
    %cst_22 = arith.constant dense<0.000000e+00> : vector<3x128xf32>
    %130 = vector.multi_reduction <add>, %129, %cst_22 [1] : vector<3x8x128xf32> to vector<3x128xf32>
    %131 = arith.subf %119, %130 : vector<3x128xf32>
    %c0_i32_23 = arith.constant 0 : i32
    %132 = vector.broadcast %c0_i32_23 : i32 to vector<3x8x128xi32>
    %133 = arith.select %123, %21, %132 : vector<3x8x128xi1>, vector<3x8x128xi32>
    %cst_24 = arith.constant dense<0> : vector<3x128xi32>
    %134 = vector.multi_reduction <add>, %133, %cst_24 [1] : vector<3x8x128xi32> to vector<3x128xi32>
    %135 = vector.shape_cast %134 : vector<3x128xi32> to vector<3x1x128xi32>
    %c0_i32_25 = arith.constant 0 : i32
    %136 = vector.broadcast %c0_i32_25 : i32 to vector<3x8x128xi32>
    %137 = arith.cmpi eq, %21, %136 : vector<3x8x128xi32>
    %138 = vector.shape_cast %135 : vector<3x1x128xi32> to vector<3x1x128xi32>
    %139 = vector.broadcast %138 : vector<3x1x128xi32> to vector<3x8x128xi32>
    %140 = arith.select %137, %139, %121 : vector<3x8x128xi1>, vector<3x8x128xi32>
    %c1_i32_26 = arith.constant 1 : i32
    %141 = vector.broadcast %c1_i32_26 : i32 to vector<3x8x128xi32>
    %142 = arith.cmpi eq, %110, %141 : vector<3x8x128xi32>
    %cst_27 = arith.constant 9.99999991E-38 : f32
    %143 = vector.broadcast %cst_27 : f32 to vector<3x128xf32>
    %144 = arith.maximumf %131, %143 : vector<3x128xf32>
    %145 = math.log %144 : vector<3x128xf32>
    %146 = arith.addf %127, %145 : vector<3x128xf32>
    %cst_28 = arith.constant 0.000000e+00 : f32
    %147 = vector.broadcast %cst_28 : f32 to vector<3x8x128xf32>
    %148 = arith.select %142, %118, %147 : vector<3x8x128xi1>, vector<3x8x128xf32>
    %cst_29 = arith.constant dense<0.000000e+00> : vector<3x128xf32>
    %149 = vector.multi_reduction <add>, %148, %cst_29 [1] : vector<3x8x128xf32> to vector<3x128xf32>
    %150 = arith.subf %131, %149 : vector<3x128xf32>
    %c0_i32_30 = arith.constant 0 : i32
    %151 = vector.broadcast %c0_i32_30 : i32 to vector<3x8x128xi32>
    %152 = arith.select %142, %21, %151 : vector<3x8x128xi1>, vector<3x8x128xi32>
    %cst_31 = arith.constant dense<0> : vector<3x128xi32>
    %153 = vector.multi_reduction <add>, %152, %cst_31 [1] : vector<3x8x128xi32> to vector<3x128xi32>
    %154 = vector.shape_cast %153 : vector<3x128xi32> to vector<3x1x128xi32>
    %c1_i32_32 = arith.constant 1 : i32
    %155 = vector.broadcast %c1_i32_32 : i32 to vector<3x8x128xi32>
    %156 = arith.cmpi eq, %21, %155 : vector<3x8x128xi32>
    %157 = vector.shape_cast %154 : vector<3x1x128xi32> to vector<3x1x128xi32>
    %158 = vector.broadcast %157 : vector<3x1x128xi32> to vector<3x8x128xi32>
    %159 = arith.select %156, %158, %140 : vector<3x8x128xi1>, vector<3x8x128xi32>
    %c2_i32_33 = arith.constant 2 : i32
    %160 = vector.broadcast %c2_i32_33 : i32 to vector<3x8x128xi32>
    %161 = arith.cmpi eq, %110, %160 : vector<3x8x128xi32>
    %cst_34 = arith.constant 9.99999991E-38 : f32
    %162 = vector.broadcast %cst_34 : f32 to vector<3x128xf32>
    %163 = arith.maximumf %150, %162 : vector<3x128xf32>
    %164 = math.log %163 : vector<3x128xf32>
    %165 = arith.addf %146, %164 : vector<3x128xf32>
    %cst_35 = arith.constant 0.000000e+00 : f32
    %166 = vector.broadcast %cst_35 : f32 to vector<3x8x128xf32>
    %167 = arith.select %161, %118, %166 : vector<3x8x128xi1>, vector<3x8x128xf32>
    %cst_36 = arith.constant dense<0.000000e+00> : vector<3x128xf32>
    %168 = vector.multi_reduction <add>, %167, %cst_36 [1] : vector<3x8x128xf32> to vector<3x128xf32>
    %169 = arith.subf %150, %168 : vector<3x128xf32>
    %c0_i32_37 = arith.constant 0 : i32
    %170 = vector.broadcast %c0_i32_37 : i32 to vector<3x8x128xi32>
    %171 = arith.select %161, %21, %170 : vector<3x8x128xi1>, vector<3x8x128xi32>
    %cst_38 = arith.constant dense<0> : vector<3x128xi32>
    %172 = vector.multi_reduction <add>, %171, %cst_38 [1] : vector<3x8x128xi32> to vector<3x128xi32>
    %173 = vector.shape_cast %172 : vector<3x128xi32> to vector<3x1x128xi32>
    %c2_i32_39 = arith.constant 2 : i32
    %174 = vector.broadcast %c2_i32_39 : i32 to vector<3x8x128xi32>
    %175 = arith.cmpi eq, %21, %174 : vector<3x8x128xi32>
    %176 = vector.shape_cast %173 : vector<3x1x128xi32> to vector<3x1x128xi32>
    %177 = vector.broadcast %176 : vector<3x1x128xi32> to vector<3x8x128xi32>
    %178 = arith.select %175, %177, %159 : vector<3x8x128xi1>, vector<3x8x128xi32>
    %c3_i32_40 = arith.constant 3 : i32
    %179 = vector.broadcast %c3_i32_40 : i32 to vector<3x8x128xi32>
    %180 = arith.cmpi eq, %110, %179 : vector<3x8x128xi32>
    %cst_41 = arith.constant 9.99999991E-38 : f32
    %181 = vector.broadcast %cst_41 : f32 to vector<3x128xf32>
    %182 = arith.maximumf %169, %181 : vector<3x128xf32>
    %183 = math.log %182 : vector<3x128xf32>
    %184 = arith.addf %165, %183 : vector<3x128xf32>
    %cst_42 = arith.constant 0.000000e+00 : f32
    %185 = vector.broadcast %cst_42 : f32 to vector<3x8x128xf32>
    %186 = arith.select %180, %118, %185 : vector<3x8x128xi1>, vector<3x8x128xf32>
    %cst_43 = arith.constant dense<0.000000e+00> : vector<3x128xf32>
    %187 = vector.multi_reduction <add>, %186, %cst_43 [1] : vector<3x8x128xf32> to vector<3x128xf32>
    %188 = arith.subf %169, %187 : vector<3x128xf32>
    %c0_i32_44 = arith.constant 0 : i32
    %189 = vector.broadcast %c0_i32_44 : i32 to vector<3x8x128xi32>
    %190 = arith.select %180, %21, %189 : vector<3x8x128xi1>, vector<3x8x128xi32>
    %cst_45 = arith.constant dense<0> : vector<3x128xi32>
    %191 = vector.multi_reduction <add>, %190, %cst_45 [1] : vector<3x8x128xi32> to vector<3x128xi32>
    %192 = vector.shape_cast %191 : vector<3x128xi32> to vector<3x1x128xi32>
    %c3_i32_46 = arith.constant 3 : i32
    %193 = vector.broadcast %c3_i32_46 : i32 to vector<3x8x128xi32>
    %194 = arith.cmpi eq, %21, %193 : vector<3x8x128xi32>
    %195 = vector.shape_cast %192 : vector<3x1x128xi32> to vector<3x1x128xi32>
    %196 = vector.broadcast %195 : vector<3x1x128xi32> to vector<3x8x128xi32>
    %197 = arith.select %194, %196, %178 : vector<3x8x128xi1>, vector<3x8x128xi32>
    %c4_i32_47 = arith.constant 4 : i32
    %198 = vector.broadcast %c4_i32_47 : i32 to vector<3x8x128xi32>
    %199 = arith.cmpi eq, %110, %198 : vector<3x8x128xi32>
    %cst_48 = arith.constant 9.99999991E-38 : f32
    %200 = vector.broadcast %cst_48 : f32 to vector<3x128xf32>
    %201 = arith.maximumf %188, %200 : vector<3x128xf32>
    %202 = math.log %201 : vector<3x128xf32>
    %203 = arith.addf %184, %202 : vector<3x128xf32>
    %cst_49 = arith.constant 0.000000e+00 : f32
    %204 = vector.broadcast %cst_49 : f32 to vector<3x8x128xf32>
    %205 = arith.select %199, %118, %204 : vector<3x8x128xi1>, vector<3x8x128xf32>
    %cst_50 = arith.constant dense<0.000000e+00> : vector<3x128xf32>
    %206 = vector.multi_reduction <add>, %205, %cst_50 [1] : vector<3x8x128xf32> to vector<3x128xf32>
    %207 = arith.subf %188, %206 : vector<3x128xf32>
    %c0_i32_51 = arith.constant 0 : i32
    %208 = vector.broadcast %c0_i32_51 : i32 to vector<3x8x128xi32>
    %209 = arith.select %199, %21, %208 : vector<3x8x128xi1>, vector<3x8x128xi32>
    %cst_52 = arith.constant dense<0> : vector<3x128xi32>
    %210 = vector.multi_reduction <add>, %209, %cst_52 [1] : vector<3x8x128xi32> to vector<3x128xi32>
    %211 = vector.shape_cast %210 : vector<3x128xi32> to vector<3x1x128xi32>
    %c4_i32_53 = arith.constant 4 : i32
    %212 = vector.broadcast %c4_i32_53 : i32 to vector<3x8x128xi32>
    %213 = arith.cmpi eq, %21, %212 : vector<3x8x128xi32>
    %214 = vector.shape_cast %211 : vector<3x1x128xi32> to vector<3x1x128xi32>
    %215 = vector.broadcast %214 : vector<3x1x128xi32> to vector<3x8x128xi32>
    %216 = arith.select %213, %215, %197 : vector<3x8x128xi1>, vector<3x8x128xi32>
    %c5_i32_54 = arith.constant 5 : i32
    %217 = vector.broadcast %c5_i32_54 : i32 to vector<3x8x128xi32>
    %218 = arith.cmpi eq, %110, %217 : vector<3x8x128xi32>
    %cst_55 = arith.constant 9.99999991E-38 : f32
    %219 = vector.broadcast %cst_55 : f32 to vector<3x128xf32>
    %220 = arith.maximumf %207, %219 : vector<3x128xf32>
    %221 = math.log %220 : vector<3x128xf32>
    %222 = arith.addf %203, %221 : vector<3x128xf32>
    %cst_56 = arith.constant 0.000000e+00 : f32
    %223 = vector.broadcast %cst_56 : f32 to vector<3x8x128xf32>
    %224 = arith.select %218, %118, %223 : vector<3x8x128xi1>, vector<3x8x128xf32>
    %cst_57 = arith.constant dense<0.000000e+00> : vector<3x128xf32>
    %225 = vector.multi_reduction <add>, %224, %cst_57 [1] : vector<3x8x128xf32> to vector<3x128xf32>
    %226 = arith.subf %207, %225 : vector<3x128xf32>
    %c0_i32_58 = arith.constant 0 : i32
    %227 = vector.broadcast %c0_i32_58 : i32 to vector<3x8x128xi32>
    %228 = arith.select %218, %21, %227 : vector<3x8x128xi1>, vector<3x8x128xi32>
    %cst_59 = arith.constant dense<0> : vector<3x128xi32>
    %229 = vector.multi_reduction <add>, %228, %cst_59 [1] : vector<3x8x128xi32> to vector<3x128xi32>
    %230 = vector.shape_cast %229 : vector<3x128xi32> to vector<3x1x128xi32>
    %c5_i32_60 = arith.constant 5 : i32
    %231 = vector.broadcast %c5_i32_60 : i32 to vector<3x8x128xi32>
    %232 = arith.cmpi eq, %21, %231 : vector<3x8x128xi32>
    %233 = vector.shape_cast %230 : vector<3x1x128xi32> to vector<3x1x128xi32>
    %234 = vector.broadcast %233 : vector<3x1x128xi32> to vector<3x8x128xi32>
    %235 = arith.select %232, %234, %216 : vector<3x8x128xi1>, vector<3x8x128xi32>
    %c6_i32_61 = arith.constant 6 : i32
    %236 = vector.broadcast %c6_i32_61 : i32 to vector<3x8x128xi32>
    %237 = arith.cmpi eq, %110, %236 : vector<3x8x128xi32>
    %cst_62 = arith.constant 9.99999991E-38 : f32
    %238 = vector.broadcast %cst_62 : f32 to vector<3x128xf32>
    %239 = arith.maximumf %226, %238 : vector<3x128xf32>
    %240 = math.log %239 : vector<3x128xf32>
    %241 = arith.addf %222, %240 : vector<3x128xf32>
    %cst_63 = arith.constant 0.000000e+00 : f32
    %242 = vector.broadcast %cst_63 : f32 to vector<3x8x128xf32>
    %243 = arith.select %237, %118, %242 : vector<3x8x128xi1>, vector<3x8x128xf32>
    %cst_64 = arith.constant dense<0.000000e+00> : vector<3x128xf32>
    %244 = vector.multi_reduction <add>, %243, %cst_64 [1] : vector<3x8x128xf32> to vector<3x128xf32>
    %245 = arith.subf %226, %244 : vector<3x128xf32>
    %c0_i32_65 = arith.constant 0 : i32
    %246 = vector.broadcast %c0_i32_65 : i32 to vector<3x8x128xi32>
    %247 = arith.select %237, %21, %246 : vector<3x8x128xi1>, vector<3x8x128xi32>
    %cst_66 = arith.constant dense<0> : vector<3x128xi32>
    %248 = vector.multi_reduction <add>, %247, %cst_66 [1] : vector<3x8x128xi32> to vector<3x128xi32>
    %249 = vector.shape_cast %248 : vector<3x128xi32> to vector<3x1x128xi32>
    %c6_i32_67 = arith.constant 6 : i32
    %250 = vector.broadcast %c6_i32_67 : i32 to vector<3x8x128xi32>
    %251 = arith.cmpi eq, %21, %250 : vector<3x8x128xi32>
    %252 = vector.shape_cast %249 : vector<3x1x128xi32> to vector<3x1x128xi32>
    %253 = vector.broadcast %252 : vector<3x1x128xi32> to vector<3x8x128xi32>
    %254 = arith.select %251, %253, %235 : vector<3x8x128xi1>, vector<3x8x128xi32>
    %c7_i32_68 = arith.constant 7 : i32
    %255 = vector.broadcast %c7_i32_68 : i32 to vector<3x8x128xi32>
    %256 = arith.cmpi eq, %110, %255 : vector<3x8x128xi32>
    %cst_69 = arith.constant 9.99999991E-38 : f32
    %257 = vector.broadcast %cst_69 : f32 to vector<3x128xf32>
    %258 = arith.maximumf %245, %257 : vector<3x128xf32>
    %259 = math.log %258 : vector<3x128xf32>
    %260 = arith.addf %241, %259 : vector<3x128xf32>
    %c0_i32_70 = arith.constant 0 : i32
    %261 = vector.broadcast %c0_i32_70 : i32 to vector<3x8x128xi32>
    %262 = arith.select %256, %21, %261 : vector<3x8x128xi1>, vector<3x8x128xi32>
    %cst_71 = arith.constant dense<0> : vector<3x128xi32>
    %263 = vector.multi_reduction <add>, %262, %cst_71 [1] : vector<3x8x128xi32> to vector<3x128xi32>
    %264 = vector.shape_cast %263 : vector<3x128xi32> to vector<3x1x128xi32>
    %c7_i32_72 = arith.constant 7 : i32
    %265 = vector.broadcast %c7_i32_72 : i32 to vector<3x8x128xi32>
    %266 = arith.cmpi eq, %21, %265 : vector<3x8x128xi32>
    %267 = vector.shape_cast %264 : vector<3x1x128xi32> to vector<3x1x128xi32>
    %268 = vector.broadcast %267 : vector<3x1x128xi32> to vector<3x8x128xi32>
    %269 = arith.select %266, %268, %254 : vector<3x8x128xi1>, vector<3x8x128xi32>
    %c0_73 = arith.constant 0 : index
    %c0_74 = arith.constant 0 : index
    %c0_75 = arith.constant 0 : index
    %270 = vector.load %arg5[%c0_73, %c0_74, %c0_75] : memref<3x8x128xi32, #tpu.memory_space<vmem>>, vector<3x8x128xi32>
    tpu.vector_store %arg5[%c0_73, %c0_74, %c0_75], %269 {strides = array<i32>} : memref<3x8x128xi32, #tpu.memory_space<vmem>>, vector<3x8x128xi32>,
    %271 = vector.broadcast %112 : vector<1x128xf32> to vector<8x128xf32>
    %272 = arith.subf %5, %271 : vector<8x128xf32>
    %cst_76 = arith.constant dense<0.000000e+00> : vector<128xf32>
    %273 = vector.multi_reduction <add>, %272, %cst_76 [0] : vector<8x128xf32> to vector<128xf32>
    %274 = vector.shape_cast %273 : vector<128xf32> to vector<1x128xf32>
    %275 = vector.broadcast %274 : vector<1x128xf32> to vector<3x128xf32>
    %276 = arith.subf %275, %260 : vector<3x128xf32>
    %c0_77 = arith.constant 0 : index
    %c0_78 = arith.constant 0 : index
    %277 = vector.load %arg6[%c0_77, %c0_78] : memref<3x128xf32, #tpu.memory_space<vmem>>, vector<3x128xf32>
    tpu.vector_store %arg6[%c0_77, %c0_78], %276 {strides = array<i32>} : memref<3x128xf32, #tpu.memory_space<vmem>>, vector<3x128xf32>,
    return
  }
  func.func @transform_0(%arg0: i32) -> (i32, i32) {
    %c0_i32 = arith.constant 0 : i32
    %c0_i32_0 = arith.constant 0 : i32
    return %arg0, %c0_i32 : i32, i32
  }
  func.func @transform_1(%arg0: i32) -> (i32, i32) {
    %c0_i32 = arith.constant 0 : i32
    %c0_i32_0 = arith.constant 0 : i32
    %c0_i32_1 = arith.constant 0 : i32
    return %c0_i32, %c0_i32_0 : i32, i32
  }
  func.func @transform_2(%arg0: i32) -> (i32, i32) {
    %c0_i32 = arith.constant 0 : i32
    %c0_i32_0 = arith.constant 0 : i32
    %c0_i32_1 = arith.constant 0 : i32
    return %c0_i32, %c0_i32_0 : i32, i32
  }
  func.func @transform_3(%arg0: i32) -> (i32, i32, i32) {
    %c0_i32 = arith.constant 0 : i32
    %c0_i32_0 = arith.constant 0 : i32
    %c0_i32_1 = arith.constant 0 : i32
    return %c0_i32, %c0_i32_0, %arg0 : i32, i32, i32
  }
  func.func @transform_4(%arg0: i32) -> (i32, i32, i32) {
    %c0_i32 = arith.constant 0 : i32
    %c0_i32_0 = arith.constant 0 : i32
    %c0_i32_1 = arith.constant 0 : i32
    return %c0_i32, %c0_i32_0, %arg0 : i32, i32, i32
  }
  func.func @transform_5(%arg0: i32) -> (i32, i32) {
    %c0_i32 = arith.constant 0 : i32
    %c0_i32_0 = arith.constant 0 : i32
    return %c0_i32, %arg0 : i32, i32
  }
  func.func @transform_6(%arg0: i32) -> (i32, i32) {
    %c0_i32 = arith.constant 0 : i32
    %c0_i32_0 = arith.constant 0 : i32
    return %c0_i32, %arg0 : i32, i32
  }
}

</mosaic_0001>

<llo_original>
// kernel: tpu_custom_call.1
$region0: #{tpu_custom_call.1}
  #allocation0 [shape = 'u32[]', space=smem, size = 0x4, offset = 0x4, fixed_abs, tag = 'smem constant byte address 0x4 - core index']
  #allocation1 [shape = 'u32[72,128]{1,0:T(1,128)}', space=vmem, size = 0x9000, scoped, tag = 'internal scratch']
  %s0 = inlined_call_operand.vmem [shape: f32[128,32], index: 0, kind: input, shape index: {}]
  %s1 = inlined_call_operand.vmem [shape: f32[8,32], index: 1, kind: input, shape index: {}]
  %s2 = inlined_call_operand.vmem [shape: f32[8,1], index: 2, kind: input, shape index: {}]
  %s3 = inlined_call_operand.vmem [shape: f32[3,8,128], index: 3, kind: input, shape index: {}]
  %s4 = inlined_call_operand.hbm [shape: s32[3,8,128], index: 4, kind: output, shape index: {0}]
  %s5 = inlined_call_operand.hbm [shape: f32[3,128], index: 5, kind: output, shape index: {1}]
  %s6 = inlined_call_operand.hbm [shape: f32[8,128], index: 6, kind: output, shape index: {2}]
  %7 = xla_tuple %s4, %s5, %s6
  %s8 = sld [smem:[#allocation0]]
  $region42: #{tpu_custom_call.1} parent=0
    _
  %s10 = ssub.s32 1, %s8
  %s11 = scalar_select 0, %s10, %s8
  $region1: #{tpu_custom_call.1} parent=0
    #allocation2 [shape = 'u8[12288]{0}', space=vmem, size = 0x3000, scoped, tag = 'output window, operand 0, single buffered']
    #allocation3 [shape = 's32[1]{0}', space=sflag, size = 0x4, scoped, tag = 'scoped memory for tpu_custom_call.1']
    #allocation4 [shape = 'u8[2048]{0}', space=vmem, size = 0x800, scoped, tag = 'output window, operand 1, single buffered']
    #allocation5 [shape = 's32[1]{0}', space=sflag, size = 0x4, scoped, tag = 'scoped memory for tpu_custom_call.1']
    #allocation6 [shape = 'u8[4096]{0}', space=vmem, size = 0x1000, scoped, tag = 'output window, operand 2, single buffered']
    %12 = vsyncpa [#allocation3], 0
    %13 = vsyncpa [#allocation5], 0
    // Predicated region
    $region2: #{tpu_custom_call.1} parent=1 // pred_check
      _
    $region3: #{tpu_custom_call.1} parent=1 // pred_check_branch
      %15 = sbr.rel (0) target = $region5
    $region4: #{tpu_custom_call.1} parent=1 // pred_region
      _
    $region5: #{tpu_custom_call.1} parent=1 // pred_fallthru
      _
    // Predicated region
    $region6: #{tpu_custom_call.1} parent=1 // pred_check
      _
    $region7: #{tpu_custom_call.1} parent=1 // pred_check_branch
      %17 = sbr.rel (0) target = $region9
    $region8: #{tpu_custom_call.1} parent=1 // pred_region
      _
    $region9: #{tpu_custom_call.1} parent=1 // pred_fallthru
      _
    // Predicated region
    $region10: #{tpu_custom_call.1} parent=1 // pred_check
      _
    $region11: #{tpu_custom_call.1} parent=1 // pred_check_branch
      %19 = sbr.rel (0) target = $region13
    $region12: #{tpu_custom_call.1} parent=1 // pred_region
      _
    $region13: #{tpu_custom_call.1} parent=1 // pred_fallthru
      _
    // Predicated region
    $region14: #{tpu_custom_call.1} parent=1 // pred_check
      _
    $region15: #{tpu_custom_call.1} parent=1 // pred_check_branch
      %21 = sbr.rel (0) target = $region17
    $region16: #{tpu_custom_call.1} parent=1 // pred_region
      _
    $region17: #{tpu_custom_call.1} parent=1 // pred_fallthru
      _
    %v22 = vld [vmem:[%s0] sm:$0xff]
    %v23 = vld [vmem:[%s0 + $0x8] sm:$0xff]
    %v24 = vld [vmem:[%s0 + $0x10] sm:$0xff]
    %v25 = vld [vmem:[%s0 + $0x18] sm:$0xff]
    %v26 = vld [vmem:[%s0 + $0x20] sm:$0xff]
    %v27 = vld [vmem:[%s0 + $0x28] sm:$0xff]
    %v28 = vld [vmem:[%s0 + $0x30] sm:$0xff]
    %v29 = vld [vmem:[%s0 + $0x38] sm:$0xff]
    %v30 = vld [vmem:[%s0 + $0x40] sm:$0xff]
    %v31 = vld [vmem:[%s0 + $0x48] sm:$0xff]
    %v32 = vld [vmem:[%s0 + $0x50] sm:$0xff]
    %v33 = vld [vmem:[%s0 + $0x58] sm:$0xff]
    %v34 = vld [vmem:[%s0 + $0x60] sm:$0xff]
    %v35 = vld [vmem:[%s0 + $0x68] sm:$0xff]
    %v36 = vld [vmem:[%s0 + $0x70] sm:$0xff]
    %v37 = vld [vmem:[%s0 + $0x78] sm:$0xff]
    %v38 = vld [vmem:[%s1] sm:$0xff]
    %v39 = vld [vmem:[%s2] sm:$0xff]
    %41 = vset.pattern.permute.xlu0 0
    %42 = vperm.xlu0 %41, %v39
    %v43 = vpop.permute.xlu0 %42
    %vm45 = vcmask 261120
    %v47 = vsel %vm45, %v38, 0
    %v50 = vsel %vm45, %v22, 0
    %v53 = vsel %vm45, %v23, 0
    %v56 = vsel %vm45, %v24, 0
    %v59 = vsel %vm45, %v25, 0
    %v62 = vsel %vm45, %v26, 0
    %v65 = vsel %vm45, %v27, 0
    %v68 = vsel %vm45, %v28, 0
    %v71 = vsel %vm45, %v29, 0
    %v74 = vsel %vm45, %v30, 0
    %v77 = vsel %vm45, %v31, 0
    %v80 = vsel %vm45, %v32, 0
    %v83 = vsel %vm45, %v33, 0
    %v86 = vsel %vm45, %v34, 0
    %v89 = vsel %vm45, %v35, 0
    %v92 = vsel %vm45, %v36, 0
    %v95 = vsel %vm45, %v37, 0
    %97 = vmatpush.xpose.msra.mxu0 %v95
    %98 = vmatpush.xpose.msra.mxu0 %v92
    %99 = vmatpush.xpose.msra.mxu0 %v89
    %100 = vmatpush.xpose.msra.mxu0 %v86
    %101 = vmatpush.xpose.msra.mxu0 %v83
    %102 = vmatpush.xpose.msra.mxu0 %v80
    %103 = vmatpush.xpose.msra.mxu0 %v77
    %104 = vmatpush.xpose.msra.mxu0 %v74
    %105 = vmatpush.xpose.msra.mxu0 %v71
    %106 = vmatpush.xpose.msra.mxu0 %v68
    %107 = vmatpush.xpose.msra.mxu0 %v65
    %108 = vmatpush.xpose.msra.mxu0 %v62
    %109 = vmatpush.xpose.msra.mxu0 %v59
    %110 = vmatpush.xpose.msra.mxu0 %v56
    %111 = vmatpush.xpose.msra.mxu0 %v53
    %112 = vmatpush.xpose.msra.mxu0 %v50
    %113 = vmatmul.f32.gmra.mxu0 %v47
    %v114 = vpop.f32.mrf.mxu0
    %v115 = vadd.f32 %v43, %v114
    %116 = vdwg.mxu0
    %117 = vst [vmem:[#allocation6] sm:$0xff] %v115
    %v118 = vld [vmem:[%s3] sm:$0xff]
    %v119 = vld [vmem:[%s3 + $0x8] sm:$0xff]
    %v120 = vld [vmem:[%s3 + $0x10] sm:$0xff]
    %v121 = vmax.f32 %v118, 1e-07
    %v122 = vmax.f32 %v119, 1e-07
    %v123 = vmax.f32 %v120, 1e-07
    %v124 = vmin.f32 %v121, 0.9999999
    %v125 = vmin.f32 %v122, 0.9999999
    %v126 = vmin.f32 %v123, 0.9999999
    %v127 = vlog2.pop %v124
    %v128 = vmul.f32 %v127, 0.6931472
    %v129 = vlog2.pop %v125
    %v130 = vmul.f32 %v129, 0.6931472
    %v131 = vlog2.pop %v126
    %v132 = vmul.f32 %v131, 0.6931472
    %v133 = vsub.f32 0.0, %v128
    %v134 = vsub.f32 0.0, %v130
    %v135 = vsub.f32 0.0, %v132
    %v136 = vlog2.pop %v133
    %v137 = vmul.f32 %v136, 0.6931472
    %v138 = vlog2.pop %v134
    %v139 = vmul.f32 %v138, 0.6931472
    %v140 = vlog2.pop %v135
    %v141 = vmul.f32 %v140, 0.6931472
    %v142 = vsub.f32 0.0, %v137
    %v143 = vsub.f32 0.0, %v139
    %v144 = vsub.f32 0.0, %v141
    %v145 = vadd.f32 %v115, %v142
    %v146 = vadd.f32 %v115, %v143
    %v147 = vadd.f32 %v115, %v144
    %v148 = vlaneseq
    %v149 = vshrl.u32 %v148, 7
    %v150 = vperm.slane %v145, 0
    %v151 = vperm.slane %v146, 0
    %v152 = vperm.slane %v147, 0
    %vm153 = vcmp.gt.f32.partialorder %v150, %v145
    %vm154 = vcmp.gt.f32.partialorder %v151, %v146
    %vm155 = vcmp.gt.f32.partialorder %v152, %v147
    %vm156 = vcmp.eq.f32.partialorder %v150, %v145
    %vm157 = vcmp.eq.f32.partialorder %v151, %v146
    %vm158 = vcmp.eq.f32.partialorder %v152, %v147
    %vm159 = vcmp.gt.s32.totalorder %v149, 0
    %vm160 = vmand %vm156, %vm159
    %vm161 = vmand %vm157, %vm159
    %vm162 = vmand %vm158, %vm159
    %vm163 = vmor %vm153, %vm160
    %vm164 = vmor %vm154, %vm161
    %vm165 = vmor %vm155, %vm162
    %v166 = vsel %vm163, 1, 0
    %v167 = vsel %vm164, 1, 0
    %v168 = vsel %vm165, 1, 0
    %v169 = vperm.slane %v145, 1
    %v170 = vperm.slane %v146, 1
    %v171 = vperm.slane %v147, 1
    %vm172 = vcmp.gt.f32.partialorder %v169, %v145
    %vm173 = vcmp.gt.f32.partialorder %v170, %v146
    %vm174 = vcmp.gt.f32.partialorder %v171, %v147
    %vm175 = vcmp.eq.f32.partialorder %v169, %v145
    %vm176 = vcmp.eq.f32.partialorder %v170, %v146
    %vm177 = vcmp.eq.f32.partialorder %v171, %v147
    %vm178 = vcmp.gt.s32.totalorder %v149, 1
    %vm179 = vmand %vm175, %vm178
    %vm180 = vmand %vm176, %vm178
    %vm181 = vmand %vm177, %vm178
    %vm182 = vmor %vm172, %vm179
    %vm183 = vmor %vm173, %vm180
    %vm184 = vmor %vm174, %vm181
    %v185 = vsel %vm182, 1, 0
    %v186 = vsel %vm183, 1, 0
    %v187 = vsel %vm184, 1, 0
    %v188 = vadd.s32 %v166, %v185
    %v189 = vadd.s32 %v167, %v186
    %v190 = vadd.s32 %v168, %v187
    %v191 = vperm.slane %v145, 2
    %v192 = vperm.slane %v146, 2
    %v193 = vperm.slane %v147, 2
    %vm194 = vcmp.gt.f32.partialorder %v191, %v145
    %vm195 = vcmp.gt.f32.partialorder %v192, %v146
    %vm196 = vcmp.gt.f32.partialorder %v193, %v147
    %vm197 = vcmp.eq.f32.partialorder %v191, %v145
    %vm198 = vcmp.eq.f32.partialorder %v192, %v146
    %vm199 = vcmp.eq.f32.partialorder %v193, %v147
    %vm200 = vcmp.gt.s32.totalorder %v149, 2
    %vm201 = vmand %vm197, %vm200
    %vm202 = vmand %vm198, %vm200
    %vm203 = vmand %vm199, %vm200
    %vm204 = vmor %vm194, %vm201
    %vm205 = vmor %vm195, %vm202
    %vm206 = vmor %vm196, %vm203
    %v207 = vsel %vm204, 1, 0
    %v208 = vsel %vm205, 1, 0
    %v209 = vsel %vm206, 1, 0
    %v210 = vadd.s32 %v188, %v207
    %v211 = vadd.s32 %v189, %v208
    %v212 = vadd.s32 %v190, %v209
    %v213 = vperm.slane %v145, 3
    %v214 = vperm.slane %v146, 3
    %v215 = vperm.slane %v147, 3
    %vm216 = vcmp.gt.f32.partialorder %v213, %v145
    %vm217 = vcmp.gt.f32.partialorder %v214, %v146
    %vm218 = vcmp.gt.f32.partialorder %v215, %v147
    %vm219 = vcmp.eq.f32.partialorder %v213, %v145
    %vm220 = vcmp.eq.f32.partialorder %v214, %v146
    %vm221 = vcmp.eq.f32.partialorder %v215, %v147
    %vm222 = vcmp.gt.s32.totalorder %v149, 3
    %vm223 = vmand %vm219, %vm222
    %vm224 = vmand %vm220, %vm222
    %vm225 = vmand %vm221, %vm222
    %vm226 = vmor %vm216, %vm223
    %vm227 = vmor %vm217, %vm224
    %vm228 = vmor %vm218, %vm225
    %v229 = vsel %vm226, 1, 0
    %v230 = vsel %vm227, 1, 0
    %v231 = vsel %vm228, 1, 0
    %v232 = vadd.s32 %v210, %v229
    %v233 = vadd.s32 %v211, %v230
    %v234 = vadd.s32 %v212, %v231
    %v235 = vperm.slane %v145, 4
    %v236 = vperm.slane %v146, 4
    %v237 = vperm.slane %v147, 4
    %vm238 = vcmp.gt.f32.partialorder %v235, %v145
    %vm239 = vcmp.gt.f32.partialorder %v236, %v146
    %vm240 = vcmp.gt.f32.partialorder %v237, %v147
    %vm241 = vcmp.eq.f32.partialorder %v235, %v145
    %vm242 = vcmp.eq.f32.partialorder %v236, %v146
    %vm243 = vcmp.eq.f32.partialorder %v237, %v147
    %vm244 = vcmp.gt.s32.totalorder %v149, 4
    %vm245 = vmand %vm241, %vm244
    %vm246 = vmand %vm242, %vm244
    %vm247 = vmand %vm243, %vm244
    %vm248 = vmor %vm238, %vm245
    %vm249 = vmor %vm239, %vm246
    %vm250 = vmor %vm240, %vm247
    %v251 = vsel %vm248, 1, 0
    %v252 = vsel %vm249, 1, 0
    %v253 = vsel %vm250, 1, 0
    %v254 = vadd.s32 %v232, %v251
    %v255 = vadd.s32 %v233, %v252
    %v256 = vadd.s32 %v234, %v253
    %v257 = vperm.slane %v145, 5
    %v258 = vperm.slane %v146, 5
    %v259 = vperm.slane %v147, 5
    %vm260 = vcmp.gt.f32.partialorder %v257, %v145
    %vm261 = vcmp.gt.f32.partialorder %v258, %v146
    %vm262 = vcmp.gt.f32.partialorder %v259, %v147
    %vm263 = vcmp.eq.f32.partialorder %v257, %v145
    %vm264 = vcmp.eq.f32.partialorder %v258, %v146
    %vm265 = vcmp.eq.f32.partialorder %v259, %v147
    %vm266 = vcmp.gt.s32.totalorder %v149, 5
    %vm267 = vmand %vm263, %vm266
    %vm268 = vmand %vm264, %vm266
    %vm269 = vmand %vm265, %vm266
    %vm270 = vmor %vm260, %vm267
    %vm271 = vmor %vm261, %vm268
    %vm272 = vmor %vm262, %vm269
    %v273 = vsel %vm270, 1, 0
    %v274 = vsel %vm271, 1, 0
    %v275 = vsel %vm272, 1, 0
    %v276 = vadd.s32 %v254, %v273
    %v277 = vadd.s32 %v255, %v274
    %v278 = vadd.s32 %v256, %v275
    %v279 = vperm.slane %v145, 6
    %v280 = vperm.slane %v146, 6
    %v281 = vperm.slane %v147, 6
    %vm282 = vcmp.gt.f32.partialorder %v279, %v145
    %vm283 = vcmp.gt.f32.partialorder %v280, %v146
    %vm284 = vcmp.gt.f32.partialorder %v281, %v147
    %vm285 = vcmp.eq.f32.partialorder %v279, %v145
    %vm286 = vcmp.eq.f32.partialorder %v280, %v146
    %vm287 = vcmp.eq.f32.partialorder %v281, %v147
    %vm288 = vcmp.gt.s32.totalorder %v149, 6
    %vm289 = vmand %vm285, %vm288
    %vm290 = vmand %vm286, %vm288
    %vm291 = vmand %vm287, %vm288
    %vm292 = vmor %vm282, %vm289
    %vm293 = vmor %vm283, %vm290
    %vm294 = vmor %vm284, %vm291
    %v295 = vsel %vm292, 1, 0
    %v296 = vsel %vm293, 1, 0
    %v297 = vsel %vm294, 1, 0
    %v298 = vadd.s32 %v276, %v295
    %v299 = vadd.s32 %v277, %v296
    %v300 = vadd.s32 %v278, %v297
    %v301 = vperm.slane %v145, 7
    %v302 = vperm.slane %v146, 7
    %v303 = vperm.slane %v147, 7
    %vm304 = vcmp.gt.f32.partialorder %v301, %v145
    %vm305 = vcmp.gt.f32.partialorder %v302, %v146
    %vm306 = vcmp.gt.f32.partialorder %v303, %v147
    %vm307 = vcmp.eq.f32.partialorder %v301, %v145
    %vm308 = vcmp.eq.f32.partialorder %v302, %v146
    %vm309 = vcmp.eq.f32.partialorder %v303, %v147
    %vm310 = vcmp.gt.s32.totalorder %v149, 7
    %vm311 = vmand %vm307, %vm310
    %vm312 = vmand %vm308, %vm310
    %vm313 = vmand %vm309, %vm310
    %vm314 = vmor %vm304, %vm311
    %vm315 = vmor %vm305, %vm312
    %vm316 = vmor %vm306, %vm313
    %v317 = vsel %vm314, 1, 0
    %v318 = vsel %vm315, 1, 0
    %v319 = vsel %vm316, 1, 0
    %v320 = vadd.s32 %v298, %v317
    %v321 = vadd.s32 %v299, %v318
    %v322 = vadd.s32 %v300, %v319
    %v323 = vrot.slane %v115, 4
    %v324 = vmax.f32 %v115, %v323
    %v325 = vrot.slane %v324, 2
    %v326 = vmax.f32 %v324, %v325
    %v327 = vrot.slane %v326, 1
    %v328 = vmax.f32 %v326, %v327
    %v329 = vsub.f32 %v115, %v328
    %v330 = vmul.f32 %v329, 1.442695
    %v331 = vpow.pop %v330
    %v332 = vrot.slane %v331, 4
    %v333 = vadd.f32 %v331, %v332
    %v334 = vrot.slane %v333, 2
    %v335 = vadd.f32 %v333, %v334
    %v336 = vrot.slane %v335, 1
    %v337 = vadd.f32 %v335, %v336
    %vm338 = vcmp.eq.s32.totalorder %v320, 0
    %vm339 = vcmp.eq.s32.totalorder %v321, 0
    %vm340 = vcmp.eq.s32.totalorder %v322, 0
    %v341 = vmax.f32 %v337, 1e-37
    %v342 = vlog2.pop %v341
    %v343 = vmul.f32 %v342, 0.6931472
    %v344 = vadd.f32 %v343, 0.0
    %v345 = vsel %vm338, %v331, 0.0
    %v346 = vsel %vm339, %v331, 0.0
    %v347 = vsel %vm340, %v331, 0.0
    %v348 = vrot.slane %v345, 4
    %v349 = vadd.f32 %v345, %v348
    %v350 = vrot.slane %v349, 2
    %v351 = vadd.f32 %v349, %v350
    %v352 = vrot.slane %v351, 1
    %v353 = vadd.f32 %v351, %v352
    %v354 = vrot.slane %v346, 4
    %v355 = vadd.f32 %v346, %v354
    %v356 = vrot.slane %v355, 2
    %v357 = vadd.f32 %v355, %v356
    %v358 = vrot.slane %v357, 1
    %v359 = vadd.f32 %v357, %v358
    %v360 = vrot.slane %v347, 4
    %v361 = vadd.f32 %v347, %v360
    %v362 = vrot.slane %v361, 2
    %v363 = vadd.f32 %v361, %v362
    %v364 = vrot.slane %v363, 1
    %v365 = vadd.f32 %v363, %v364
    %v366 = vsub.f32 %v337, %v353
    %v367 = vsub.f32 %v337, %v359
    %v368 = vsub.f32 %v337, %v365
    %v369 = vsel %vm338, %v149, 0
    %v370 = vsel %vm339, %v149, 0
    %v371 = vsel %vm340, %v149, 0
    %v372 = vrot.slane %v369, 4
    %v373 = vadd.s32 %v369, %v372
    %v374 = vrot.slane %v373, 2
    %v375 = vadd.s32 %v373, %v374
    %v376 = vrot.slane %v375, 1
    %v377 = vadd.s32 %v375, %v376
    %v378 = vrot.slane %v370, 4
    %v379 = vadd.s32 %v370, %v378
    %v380 = vrot.slane %v379, 2
    %v381 = vadd.s32 %v379, %v380
    %v382 = vrot.slane %v381, 1
    %v383 = vadd.s32 %v381, %v382
    %v384 = vrot.slane %v371, 4
    %v385 = vadd.s32 %v371, %v384
    %v386 = vrot.slane %v385, 2
    %v387 = vadd.s32 %v385, %v386
    %v388 = vrot.slane %v387, 1
    %v389 = vadd.s32 %v387, %v388
    %vm390 = vcmp.eq.s32.totalorder %v149, 0
    %v391 = vsel %vm390, %v377, 0
    %v392 = vsel %vm390, %v383, 0
    %v393 = vsel %vm390, %v389, 0
    %vm394 = vcmp.eq.s32.totalorder %v320, 1
    %vm395 = vcmp.eq.s32.totalorder %v321, 1
    %vm396 = vcmp.eq.s32.totalorder %v322, 1
    %v397 = vmax.f32 %v366, 1e-37
    %v398 = vmax.f32 %v367, 1e-37
    %v399 = vmax.f32 %v368, 1e-37
    %v400 = vlog2.pop %v397
    %v401 = vmul.f32 %v400, 0.6931472
    %v402 = vlog2.pop %v398
    %v403 = vmul.f32 %v402, 0.6931472
    %v404 = vlog2.pop %v399
    %v405 = vmul.f32 %v404, 0.6931472
    %v406 = vadd.f32 %v344, %v401
    %v407 = vadd.f32 %v344, %v403
    %v408 = vadd.f32 %v344, %v405
    %v409 = vsel %vm394, %v331, 0.0
    %v410 = vsel %vm395, %v331, 0.0
    %v411 = vsel %vm396, %v331, 0.0
    %v412 = vrot.slane %v409, 4
    %v413 = vadd.f32 %v409, %v412
    %v414 = vrot.slane %v413, 2
    %v415 = vadd.f32 %v413, %v414
    %v416 = vrot.slane %v415, 1
    %v417 = vadd.f32 %v415, %v416
    %v418 = vrot.slane %v410, 4
    %v419 = vadd.f32 %v410, %v418
    %v420 = vrot.slane %v419, 2
    %v421 = vadd.f32 %v419, %v420
    %v422 = vrot.slane %v421, 1
    %v423 = vadd.f32 %v421, %v422
    %v424 = vrot.slane %v411, 4
    %v425 = vadd.f32 %v411, %v424
    %v426 = vrot.slane %v425, 2
    %v427 = vadd.f32 %v425, %v426
    %v428 = vrot.slane %v427, 1
    %v429 = vadd.f32 %v427, %v428
    %v430 = vsub.f32 %v366, %v417
    %v431 = vsub.f32 %v367, %v423
    %v432 = vsub.f32 %v368, %v429
    %v433 = vsel %vm394, %v149, 0
    %v434 = vsel %vm395, %v149, 0
    %v435 = vsel %vm396, %v149, 0
    %v436 = vrot.slane %v433, 4
    %v437 = vadd.s32 %v433, %v436
    %v438 = vrot.slane %v437, 2
    %v439 = vadd.s32 %v437, %v438
    %v440 = vrot.slane %v439, 1
    %v441 = vadd.s32 %v439, %v440
    %v442 = vrot.slane %v434, 4
    %v443 = vadd.s32 %v434, %v442
    %v444 = vrot.slane %v443, 2
    %v445 = vadd.s32 %v443, %v444
    %v446 = vrot.slane %v445, 1
    %v447 = vadd.s32 %v445, %v446
    %v448 = vrot.slane %v435, 4
    %v449 = vadd.s32 %v435, %v448
    %v450 = vrot.slane %v449, 2
    %v451 = vadd.s32 %v449, %v450
    %v452 = vrot.slane %v451, 1
    %v453 = vadd.s32 %v451, %v452
    %vm454 = vcmp.eq.s32.totalorder %v149, 1
    %v455 = vsel %vm454, %v441, %v391
    %v456 = vsel %vm454, %v447, %v392
    %v457 = vsel %vm454, %v453, %v393
    %vm458 = vcmp.eq.s32.totalorder %v320, 2
    %vm459 = vcmp.eq.s32.totalorder %v321, 2
    %vm460 = vcmp.eq.s32.totalorder %v322, 2
    %v461 = vmax.f32 %v430, 1e-37
    %v462 = vmax.f32 %v431, 1e-37
    %v463 = vmax.f32 %v432, 1e-37
    %v464 = vlog2.pop %v461
    %v465 = vmul.f32 %v464, 0.6931472
    %v466 = vlog2.pop %v462
    %v467 = vmul.f32 %v466, 0.6931472
    %v468 = vlog2.pop %v463
    %v469 = vmul.f32 %v468, 0.6931472
    %v470 = vadd.f32 %v406, %v465
    %v471 = vadd.f32 %v407, %v467
    %v472 = vadd.f32 %v408, %v469
    %v473 = vsel %vm458, %v331, 0.0
    %v474 = vsel %vm459, %v331, 0.0
    %v475 = vsel %vm460, %v331, 0.0
    %v476 = vrot.slane %v473, 4
    %v477 = vadd.f32 %v473, %v476
    %v478 = vrot.slane %v477, 2
    %v479 = vadd.f32 %v477, %v478
    %v480 = vrot.slane %v479, 1
    %v481 = vadd.f32 %v479, %v480
    %v482 = vrot.slane %v474, 4
    %v483 = vadd.f32 %v474, %v482
    %v484 = vrot.slane %v483, 2
    %v485 = vadd.f32 %v483, %v484
    %v486 = vrot.slane %v485, 1
    %v487 = vadd.f32 %v485, %v486
    %v488 = vrot.slane %v475, 4
    %v489 = vadd.f32 %v475, %v488
    %v490 = vrot.slane %v489, 2
    %v491 = vadd.f32 %v489, %v490
    %v492 = vrot.slane %v491, 1
    %v493 = vadd.f32 %v491, %v492
    %v494 = vsub.f32 %v430, %v481
    %v495 = vsub.f32 %v431, %v487
    %v496 = vsub.f32 %v432, %v493
    %v497 = vsel %vm458, %v149, 0
    %v498 = vsel %vm459, %v149, 0
    %v499 = vsel %vm460, %v149, 0
    %v500 = vrot.slane %v497, 4
    %v501 = vadd.s32 %v497, %v500
    %v502 = vrot.slane %v501, 2
    %v503 = vadd.s32 %v501, %v502
    %v504 = vrot.slane %v503, 1
    %v505 = vadd.s32 %v503, %v504
    %v506 = vrot.slane %v498, 4
    %v507 = vadd.s32 %v498, %v506
    %v508 = vrot.slane %v507, 2
    %v509 = vadd.s32 %v507, %v508
    %v510 = vrot.slane %v509, 1
    %v511 = vadd.s32 %v509, %v510
    %v512 = vrot.slane %v499, 4
    %v513 = vadd.s32 %v499, %v512
    %v514 = vrot.slane %v513, 2
    %v515 = vadd.s32 %v513, %v514
    %v516 = vrot.slane %v515, 1
    %v517 = vadd.s32 %v515, %v516
    %vm518 = vcmp.eq.s32.totalorder %v149, 2
    %v519 = vsel %vm518, %v505, %v455
    %v520 = vsel %vm518, %v511, %v456
    %v521 = vsel %vm518, %v517, %v457
    %vm522 = vcmp.eq.s32.totalorder %v320, 3
    %vm523 = vcmp.eq.s32.totalorder %v321, 3
    %vm524 = vcmp.eq.s32.totalorder %v322, 3
    %v525 = vmax.f32 %v494, 1e-37
    %v526 = vmax.f32 %v495, 1e-37
    %v527 = vmax.f32 %v496, 1e-37
    %v528 = vlog2.pop %v525
    %v529 = vmul.f32 %v528, 0.6931472
    %v530 = vlog2.pop %v526
    %v531 = vmul.f32 %v530, 0.6931472
    %v532 = vlog2.pop %v527
    %v533 = vmul.f32 %v532, 0.6931472
    %v534 = vadd.f32 %v470, %v529
    %v535 = vadd.f32 %v471, %v531
    %v536 = vadd.f32 %v472, %v533
    %v537 = vsel %vm522, %v331, 0.0
    %v538 = vsel %vm523, %v331, 0.0
    %v539 = vsel %vm524, %v331, 0.0
    %v540 = vrot.slane %v537, 4
    %v541 = vadd.f32 %v537, %v540
    %v542 = vrot.slane %v541, 2
    %v543 = vadd.f32 %v541, %v542
    %v544 = vrot.slane %v543, 1
    %v545 = vadd.f32 %v543, %v544
    %v546 = vrot.slane %v538, 4
    %v547 = vadd.f32 %v538, %v546
    %v548 = vrot.slane %v547, 2
    %v549 = vadd.f32 %v547, %v548
    %v550 = vrot.slane %v549, 1
    %v551 = vadd.f32 %v549, %v550
    %v552 = vrot.slane %v539, 4
    %v553 = vadd.f32 %v539, %v552
    %v554 = vrot.slane %v553, 2
    %v555 = vadd.f32 %v553, %v554
    %v556 = vrot.slane %v555, 1
    %v557 = vadd.f32 %v555, %v556
    %v558 = vsub.f32 %v494, %v545
    %v559 = vsub.f32 %v495, %v551
    %v560 = vsub.f32 %v496, %v557
    %v561 = vsel %vm522, %v149, 0
    %v562 = vsel %vm523, %v149, 0
    %v563 = vsel %vm524, %v149, 0
    %v564 = vrot.slane %v561, 4
    %v565 = vadd.s32 %v561, %v564
    %v566 = vrot.slane %v565, 2
    %v567 = vadd.s32 %v565, %v566
    %v568 = vrot.slane %v567, 1
    %v569 = vadd.s32 %v567, %v568
    %v570 = vrot.slane %v562, 4
    %v571 = vadd.s32 %v562, %v570
    %v572 = vrot.slane %v571, 2
    %v573 = vadd.s32 %v571, %v572
    %v574 = vrot.slane %v573, 1
    %v575 = vadd.s32 %v573, %v574
    %v576 = vrot.slane %v563, 4
    %v577 = vadd.s32 %v563, %v576
    %v578 = vrot.slane %v577, 2
    %v579 = vadd.s32 %v577, %v578
    %v580 = vrot.slane %v579, 1
    %v581 = vadd.s32 %v579, %v580
    %vm582 = vcmp.eq.s32.totalorder %v149, 3
    %v583 = vsel %vm582, %v569, %v519
    %v584 = vsel %vm582, %v575, %v520
    %v585 = vsel %vm582, %v581, %v521
    %vm586 = vcmp.eq.s32.totalorder %v320, 4
    %vm587 = vcmp.eq.s32.totalorder %v321, 4
    %vm588 = vcmp.eq.s32.totalorder %v322, 4
    %v589 = vmax.f32 %v558, 1e-37
    %v590 = vmax.f32 %v559, 1e-37
    %v591 = vmax.f32 %v560, 1e-37
    %v592 = vlog2.pop %v589
    %v593 = vmul.f32 %v592, 0.6931472
    %v594 = vlog2.pop %v590
    %v595 = vmul.f32 %v594, 0.6931472
    %v596 = vlog2.pop %v591
    %v597 = vmul.f32 %v596, 0.6931472
    %v598 = vadd.f32 %v534, %v593
    %v599 = vadd.f32 %v535, %v595
    %v600 = vadd.f32 %v536, %v597
    %v601 = vsel %vm586, %v331, 0.0
    %v602 = vsel %vm587, %v331, 0.0
    %v603 = vsel %vm588, %v331, 0.0
    %v604 = vrot.slane %v601, 4
    %v605 = vadd.f32 %v601, %v604
    %v606 = vrot.slane %v605, 2
    %v607 = vadd.f32 %v605, %v606
    %v608 = vrot.slane %v607, 1
    %v609 = vadd.f32 %v607, %v608
    %v610 = vrot.slane %v602, 4
    %v611 = vadd.f32 %v602, %v610
    %v612 = vrot.slane %v611, 2
    %v613 = vadd.f32 %v611, %v612
    %v614 = vrot.slane %v613, 1
    %v615 = vadd.f32 %v613, %v614
    %v616 = vrot.slane %v603, 4
    %v617 = vadd.f32 %v603, %v616
    %v618 = vrot.slane %v617, 2
    %v619 = vadd.f32 %v617, %v618
    %v620 = vrot.slane %v619, 1
    %v621 = vadd.f32 %v619, %v620
    %v622 = vsub.f32 %v558, %v609
    %v623 = vsub.f32 %v559, %v615
    %v624 = vsub.f32 %v560, %v621
    %v625 = vsel %vm586, %v149, 0
    %v626 = vsel %vm587, %v149, 0
    %v627 = vsel %vm588, %v149, 0
    %v628 = vrot.slane %v625, 4
    %v629 = vadd.s32 %v625, %v628
    %v630 = vrot.slane %v629, 2
    %v631 = vadd.s32 %v629, %v630
    %v632 = vrot.slane %v631, 1
    %v633 = vadd.s32 %v631, %v632
    %v634 = vrot.slane %v626, 4
    %v635 = vadd.s32 %v626, %v634
    %v636 = vrot.slane %v635, 2
    %v637 = vadd.s32 %v635, %v636
    %v638 = vrot.slane %v637, 1
    %v639 = vadd.s32 %v637, %v638
    %v640 = vrot.slane %v627, 4
    %v641 = vadd.s32 %v627, %v640
    %v642 = vrot.slane %v641, 2
    %v643 = vadd.s32 %v641, %v642
    %v644 = vrot.slane %v643, 1
    %v645 = vadd.s32 %v643, %v644
    %vm646 = vcmp.eq.s32.totalorder %v149, 4
    %v647 = vsel %vm646, %v633, %v583
    %v648 = vsel %vm646, %v639, %v584
    %v649 = vsel %vm646, %v645, %v585
    %vm650 = vcmp.eq.s32.totalorder %v320, 5
    %vm651 = vcmp.eq.s32.totalorder %v321, 5
    %vm652 = vcmp.eq.s32.totalorder %v322, 5
    %v653 = vmax.f32 %v622, 1e-37
    %v654 = vmax.f32 %v623, 1e-37
    %v655 = vmax.f32 %v624, 1e-37
    %v656 = vlog2.pop %v653
    %v657 = vmul.f32 %v656, 0.6931472
    %v658 = vlog2.pop %v654
    %v659 = vmul.f32 %v658, 0.6931472
    %v660 = vlog2.pop %v655
    %v661 = vmul.f32 %v660, 0.6931472
    %v662 = vadd.f32 %v598, %v657
    %v663 = vadd.f32 %v599, %v659
    %v664 = vadd.f32 %v600, %v661
    %v665 = vsel %vm650, %v331, 0.0
    %v666 = vsel %vm651, %v331, 0.0
    %v667 = vsel %vm652, %v331, 0.0
    %v668 = vrot.slane %v665, 4
    %v669 = vadd.f32 %v665, %v668
    %v670 = vrot.slane %v669, 2
    %v671 = vadd.f32 %v669, %v670
    %v672 = vrot.slane %v671, 1
    %v673 = vadd.f32 %v671, %v672
    %v674 = vrot.slane %v666, 4
    %v675 = vadd.f32 %v666, %v674
    %v676 = vrot.slane %v675, 2
    %v677 = vadd.f32 %v675, %v676
    %v678 = vrot.slane %v677, 1
    %v679 = vadd.f32 %v677, %v678
    %v680 = vrot.slane %v667, 4
    %v681 = vadd.f32 %v667, %v680
    %v682 = vrot.slane %v681, 2
    %v683 = vadd.f32 %v681, %v682
    %v684 = vrot.slane %v683, 1
    %v685 = vadd.f32 %v683, %v684
    %v686 = vsub.f32 %v622, %v673
    %v687 = vsub.f32 %v623, %v679
    %v688 = vsub.f32 %v624, %v685
    %v689 = vsel %vm650, %v149, 0
    %v690 = vsel %vm651, %v149, 0
    %v691 = vsel %vm652, %v149, 0
    %v692 = vrot.slane %v689, 4
    %v693 = vadd.s32 %v689, %v692
    %v694 = vrot.slane %v693, 2
    %v695 = vadd.s32 %v693, %v694
    %v696 = vrot.slane %v695, 1
    %v697 = vadd.s32 %v695, %v696
    %v698 = vrot.slane %v690, 4
    %v699 = vadd.s32 %v690, %v698
    %v700 = vrot.slane %v699, 2
    %v701 = vadd.s32 %v699, %v700
    %v702 = vrot.slane %v701, 1
    %v703 = vadd.s32 %v701, %v702
    %v704 = vrot.slane %v691, 4
    %v705 = vadd.s32 %v691, %v704
    %v706 = vrot.slane %v705, 2
    %v707 = vadd.s32 %v705, %v706
    %v708 = vrot.slane %v707, 1
    %v709 = vadd.s32 %v707, %v708
    %vm710 = vcmp.eq.s32.totalorder %v149, 5
    %v711 = vsel %vm710, %v697, %v647
    %v712 = vsel %vm710, %v703, %v648
    %v713 = vsel %vm710, %v709, %v649
    %vm714 = vcmp.eq.s32.totalorder %v320, 6
    %vm715 = vcmp.eq.s32.totalorder %v321, 6
    %vm716 = vcmp.eq.s32.totalorder %v322, 6
    %v717 = vmax.f32 %v686, 1e-37
    %v718 = vmax.f32 %v687, 1e-37
    %v719 = vmax.f32 %v688, 1e-37
    %v720 = vlog2.pop %v717
    %v721 = vmul.f32 %v720, 0.6931472
    %v722 = vlog2.pop %v718
    %v723 = vmul.f32 %v722, 0.6931472
    %v724 = vlog2.pop %v719
    %v725 = vmul.f32 %v724, 0.6931472
    %v726 = vadd.f32 %v662, %v721
    %v727 = vadd.f32 %v663, %v723
    %v728 = vadd.f32 %v664, %v725
    %v729 = vsel %vm714, %v331, 0.0
    %v730 = vsel %vm715, %v331, 0.0
    %v731 = vsel %vm716, %v331, 0.0
    %v732 = vrot.slane %v729, 4
    %v733 = vadd.f32 %v729, %v732
    %v734 = vrot.slane %v733, 2
    %v735 = vadd.f32 %v733, %v734
    %v736 = vrot.slane %v735, 1
    %v737 = vadd.f32 %v735, %v736
    %v738 = vrot.slane %v730, 4
    %v739 = vadd.f32 %v730, %v738
    %v740 = vrot.slane %v739, 2
    %v741 = vadd.f32 %v739, %v740
    %v742 = vrot.slane %v741, 1
    %v743 = vadd.f32 %v741, %v742
    %v744 = vrot.slane %v731, 4
    %v745 = vadd.f32 %v731, %v744
    %v746 = vrot.slane %v745, 2
    %v747 = vadd.f32 %v745, %v746
    %v748 = vrot.slane %v747, 1
    %v749 = vadd.f32 %v747, %v748
    %v750 = vsub.f32 %v686, %v737
    %v751 = vsub.f32 %v687, %v743
    %v752 = vsub.f32 %v688, %v749
    %v753 = vsel %vm714, %v149, 0
    %v754 = vsel %vm715, %v149, 0
    %v755 = vsel %vm716, %v149, 0
    %v756 = vrot.slane %v753, 4
    %v757 = vadd.s32 %v753, %v756
    %v758 = vrot.slane %v757, 2
    %v759 = vadd.s32 %v757, %v758
    %v760 = vrot.slane %v759, 1
    %v761 = vadd.s32 %v759, %v760
    %v762 = vrot.slane %v754, 4
    %v763 = vadd.s32 %v754, %v762
    %v764 = vrot.slane %v763, 2
    %v765 = vadd.s32 %v763, %v764
    %v766 = vrot.slane %v765, 1
    %v767 = vadd.s32 %v765, %v766
    %v768 = vrot.slane %v755, 4
    %v769 = vadd.s32 %v755, %v768
    %v770 = vrot.slane %v769, 2
    %v771 = vadd.s32 %v769, %v770
    %v772 = vrot.slane %v771, 1
    %v773 = vadd.s32 %v771, %v772
    %vm774 = vcmp.eq.s32.totalorder %v149, 6
    %v775 = vsel %vm774, %v761, %v711
    %v776 = vsel %vm774, %v767, %v712
    %v777 = vsel %vm774, %v773, %v713
    %vm778 = vcmp.eq.s32.totalorder %v320, 7
    %vm779 = vcmp.eq.s32.totalorder %v321, 7
    %vm780 = vcmp.eq.s32.totalorder %v322, 7
    %v781 = vmax.f32 %v750, 1e-37
    %v782 = vmax.f32 %v751, 1e-37
    %v783 = vmax.f32 %v752, 1e-37
    %v784 = vlog2.pop %v781
    %v785 = vmul.f32 %v784, 0.6931472
    %v786 = vlog2.pop %v782
    %v787 = vmul.f32 %v786, 0.6931472
    %v788 = vlog2.pop %v783
    %v789 = vmul.f32 %v788, 0.6931472
    %v790 = vadd.f32 %v726, %v785
    %v791 = vadd.f32 %v727, %v787
    %v792 = vadd.f32 %v728, %v789
    %v793 = vsel %vm778, %v149, 0
    %v794 = vsel %vm779, %v149, 0
    %v795 = vsel %vm780, %v149, 0
    %v796 = vrot.slane %v793, 4
    %v797 = vadd.s32 %v793, %v796
    %v798 = vrot.slane %v797, 2
    %v799 = vadd.s32 %v797, %v798
    %v800 = vrot.slane %v799, 1
    %v801 = vadd.s32 %v799, %v800
    %v802 = vrot.slane %v794, 4
    %v803 = vadd.s32 %v794, %v802
    %v804 = vrot.slane %v803, 2
    %v805 = vadd.s32 %v803, %v804
    %v806 = vrot.slane %v805, 1
    %v807 = vadd.s32 %v805, %v806
    %v808 = vrot.slane %v795, 4
    %v809 = vadd.s32 %v795, %v808
    %v810 = vrot.slane %v809, 2
    %v811 = vadd.s32 %v809, %v810
    %v812 = vrot.slane %v811, 1
    %v813 = vadd.s32 %v811, %v812
    %vm814 = vcmp.eq.s32.totalorder %v149, 7
    %v815 = vsel %vm814, %v801, %v775
    %v816 = vsel %vm814, %v807, %v776
    %v817 = vsel %vm814, %v813, %v777
    %818 = vst [vmem:[#allocation2] sm:$0xff] %v815
    %819 = vst [vmem:[#allocation2 + $0x8] sm:$0xff] %v816
    %820 = vst [vmem:[#allocation2 + $0x10] sm:$0xff] %v817
    %v821 = vrot.slane %v329, 4
    %v822 = vadd.f32 %v329, %v821
    %v823 = vrot.slane %v822, 2
    %v824 = vadd.f32 %v822, %v823
    %v825 = vrot.slane %v824, 1
    %v826 = vadd.f32 %v824, %v825
    %vm830 = vcmask 1041409
    %v831 = vsel %vm830, %v791, %v790
    %vm832 = vcmask 1042434
    %v833 = vsel %vm832, %v792, %v831
    %v835 = vsub.f32 %v826, %v833
    %836 = vst [vmem:[#allocation4] sm:$0x7] %v835
    // Predicated region
    $region18: #{tpu_custom_call.1} parent=1 // pred_check
      _
    $region19: #{tpu_custom_call.1} parent=1 // pred_check_branch
      %838 = sbr.rel (0) target = $region21
    $region20: #{tpu_custom_call.1} parent=1 // pred_region
      %840 = vsyncadd [#allocation3], 0
      %s841 = sshll.u32 [#allocation2], 4
      %s842 = int_to_ptr.vmem [resolvable:$true] %s841
      %s843 = sshll.u32 %s4, 4
      %s844 = int_to_ptr.hbm [resolvable:$true] %s843
      %849 = dma.vmem_to_hbm [thread:$0]  %s842, 384, %s844, [#allocation3], 128, 128, 8
    $region21: #{tpu_custom_call.1} parent=1 // pred_fallthru
      _
    // Predicated region
    $region22: #{tpu_custom_call.1} parent=1 // pred_check
      _
    $region23: #{tpu_custom_call.1} parent=1 // pred_check_branch
      %851 = sbr.rel (0) target = $region25
    $region24: #{tpu_custom_call.1} parent=1 // pred_region
      %853 = vsyncadd [#allocation5], 0
      %s855 = sshll.u32 [#allocation4], 4
      %s856 = int_to_ptr.vmem [resolvable:$true] %s855
      %s857 = sshll.u32 %s5, 4
      %s858 = int_to_ptr.hbm [resolvable:$true] %s857
      %860 = dma.vmem_to_hbm [thread:$0]  %s856, 64, %s858, [#allocation5]
    $region25: #{tpu_custom_call.1} parent=1 // pred_fallthru
      _
    // Predicated region
    $region26: #{tpu_custom_call.1} parent=1 // pred_check
      _
    $region27: #{tpu_custom_call.1} parent=1 // pred_check_branch
      %862 = sbr.rel (0) target = $region29
    $region28: #{tpu_custom_call.1} parent=1 // pred_region
      %864 = vsyncadd [#allocation5], 0
      %s866 = sshll.u32 [#allocation6], 4
      %s867 = int_to_ptr.vmem [resolvable:$true] %s866
      %s868 = sshll.u32 %s6, 4
      %s869 = int_to_ptr.hbm [resolvable:$true] %s868
      %871 = dma.vmem_to_hbm [thread:$0]  %s867, 128, %s869, [#allocation5]
    $region29: #{tpu_custom_call.1} parent=1 // pred_fallthru
      _
    // Predicated region
    $region30: #{tpu_custom_call.1} parent=1 // pred_check
      _
    $region31: #{tpu_custom_call.1} parent=1 // pred_check_branch
      %873 = sbr.rel (0) target = $region33
    $region32: #{tpu_custom_call.1} parent=1 // pred_region
      %875 = dma.done [#allocation3], 384
    $region33: #{tpu_custom_call.1} parent=1 // pred_fallthru
      _
    // Predicated region
    $region34: #{tpu_custom_call.1} parent=1 // pred_check
      _
    $region35: #{tpu_custom_call.1} parent=1 // pred_check_branch
      %877 = sbr.rel (0) target = $region37
    $region36: #{tpu_custom_call.1} parent=1 // pred_region
      %879 = dma.done [#allocation5], 64
    $region37: #{tpu_custom_call.1} parent=1 // pred_fallthru
      _
    // Predicated region
    $region38: #{tpu_custom_call.1} parent=1 // pred_check
      _
    $region39: #{tpu_custom_call.1} parent=1 // pred_check_branch
      %881 = sbr.rel (0) target = $region41
    $region40: #{tpu_custom_call.1} parent=1 // pred_region
      %883 = dma.done [#allocation5], 128
    $region41: #{tpu_custom_call.1} parent=1 // pred_fallthru
      _
    %884 = vsyncpa [#allocation3], 1
    %885 = vsyncpa [#allocation5], 1

</llo_original>
